<compile_context>
chip_gen: v5e
topology: v5e:2x2
jax: 0.10.0
libtpu: 0.0.40
codegen_flags: <defaults>
</compile_context>

<pallas_src>
import math

import jax
import jax.numpy as jnp
from jax.experimental import pallas as pl
from jax.experimental.pallas import tpu as pltpu


def make_positional_encoding(d_model: int, max_seq_len: int = 200) -> jnp.ndarray:
    """Deterministic pe buffer, identical to the PyTorch __init__ math.

    Returns shape (max_seq_len, 1, d_model) float32 (matches the registered buffer).
    """
    position = jnp.arange(max_seq_len, dtype=jnp.float32)[:, None]            # (L, 1)
    div_term = jnp.exp(
        jnp.arange(0, d_model, 2, dtype=jnp.float32)
        * (-math.log(10000.0) / d_model)
    )                                                                          # (ceil(d/2),)
    angles = position * div_term                                               # (L, ceil(d/2))
    pe = jnp.zeros((max_seq_len, d_model), dtype=jnp.float32)
    pe = pe.at[:, 0::2].set(jnp.sin(angles))                                   # ceil(d/2) cols
    pe = pe.at[:, 1::2].set(jnp.cos(angles[:, : d_model // 2]))                # floor(d/2) cols
    # pe.unsqueeze(0).transpose(0, 1) -> (max_seq_len, 1, d_model)
    return pe[:, None, :]


def _pe_add_kernel(x_ref, pe_ref, o_ref):
    # x_ref:  (seq_block, b_block, D) tile in VMEM
    # pe_ref: (seq_block, D) dense 2D tile in VMEM
    # Batch broadcast happens here on VPU/XLU slots (huge slack: kernel is HBM-bound).
    o_ref[...] = (x_ref[...] + pe_ref[...][:, None, :]).astype(o_ref.dtype)
    # TODO(synk): training-mode dropout (nn.Dropout) not implemented; eval-mode
    # forward is an identity after the add.


def _round_up(v: int, m: int) -> int:
    return (v + m - 1) // m * m


def _physical_vmem_bytes() -> int:
    """Per-TensorCore VMEM capacity; conservative (v7x, 64 MiB) if unknown."""
    try:
        info = pltpu.get_tpu_info()
        v = getattr(info, "vmem_capacity_bytes", None)
        if v:
            return int(v)
    except Exception:
        pass
    return 64 * 1024 * 1024


def positional_encoder_forward(
    x: jnp.ndarray,
    pe: jnp.ndarray,
    *,
    seq_block: int | None = None,
    tile_byte_budget: int | None = None,       # per x block (Pallas double-buffers it)
    vmem_limit_bytes: int | None = None,
) -> jnp.ndarray:
    """x: (S, B, D);  pe: (max_seq_len, 1, D).  Returns x + pe[:S]."""
    S, B, D = x.shape
    max_seq_len = pe.shape[0]
    if S > max_seq_len:
        raise ValueError(f"seq_len {S} exceeds max_seq_len {max_seq_len}")

    itemsize = x.dtype.itemsize
    # Sublane tile of the second-to-last dim (8 for 32-bit, 16 for 16-bit, 32 for 8-bit).
    mult = max(1, 32 // max(itemsize, 1)) if itemsize < 4 else 8

    physical_vmem = _physical_vmem_bytes()
    is_small_vmem = physical_vmem <= 80 * 1024 * 1024          # v7x: 64 MiB per TC
    if tile_byte_budget is None:
        # Bigger tiles on v7x to amortize the ~0.35 us/step overhead against 3.2 TB/s HBM.
        tile_byte_budget = (8 if is_small_vmem else 4) * 1024 * 1024

    # --- pick b_block (second grid axis only if one sequence row is over budget) ---
    row_bytes = B * D * itemsize
    if row_bytes <= tile_byte_budget:
        b_block = B                                            # full extent: no sublane constraint
    else:
        b_block = max(mult, (tile_byte_budget // (D * itemsize)) // mult * mult)
        b_block = min(b_block, B)

    # --- pick seq_block ---
    if seq_block is None:
        x_row_bytes = b_block * D * itemsize
        seq_block = max(1, tile_byte_budget // max(x_row_bytes, 1))
    seq_block = min(seq_block, S)
    # Guarantee >= 2 grid steps over S when possible (pipelining + v7x megacore).
    if S > 1:
        seq_block = min(seq_block, pl.cdiv(S, 2))
    # pe's 2D block puts seq_block on the sublane axis: multiple of `mult` or == S.
    if seq_block < S:
        if seq_block >= mult:
            seq_block = (seq_block // mult) * mult
        else:
            seq_block = min(mult, S)

    grid = (pl.cdiv(S, seq_block), pl.cdiv(B, b_block))

    # --- derived VMEM budget: 2 bufs x (x_block + out_block + padded pe_block) + margin ---
    lane_D = _round_up(D, 128)
    x_blk_bytes = seq_block * _round_up(b_block, mult) * lane_D * itemsize
    pe_blk_bytes = _round_up(seq_block, mult) * lane_D * itemsize
    working_set = 2 * (2 * x_blk_bytes + pe_blk_bytes)
    if vmem_limit_bytes is None:
        cap = (48 if is_small_vmem else 96) * 1024 * 1024
        vmem_limit_bytes = min(max(working_set + 4 * 1024 * 1024, 16 * 1024 * 1024), cap)

    # pe: slice to S, drop the singleton batch dim (dense 2D), match x dtype
    # (halves pe DMA bytes for bf16).  Glue done once in the wrapper.
    pe_2d = pe[:S].reshape(S, D).astype(x.dtype)               # (S, D)

    return pl.pallas_call(
        _pe_add_kernel,
        out_shape=jax.ShapeDtypeStruct((S, B, D), x.dtype),
        grid=grid,
        in_specs=[
            # D equals the full extent (lane-dense, never tiled); b_block is a
            # sublane multiple or the full B.
            pl.BlockSpec((seq_block, b_block, D), lambda i, j: (i, j, 0)),
            pl.BlockSpec((seq_block, D), lambda i, j: (i, 0)),
        ],
        out_specs=pl.BlockSpec((seq_block, b_block, D), lambda i, j: (i, j, 0)),
        compiler_params=pltpu.CompilerParams(
            # Pure elementwise over independent (S, B) tiles: both axes parallel
            # so v7x shards across its two TensorCores (no-op on v5e/v6e).
            dimension_semantics=("parallel", "parallel"),
            vmem_limit_bytes=vmem_limit_bytes,
        ),
    )(x, pe_2d)


if __name__ == "__main__":
    # Small, lane-friendly shapes: d_model multiple of 128 (unmasked vst/vld),
    # batch fills the sublane dim, seq_len large enough that the auto-derived
    # seq_block yields a multi-step grid (pipelined path exercised).
    d_model = 128
    max_seq_len = 200
    seq_len = 64
    batch = 8

    key = jax.random.PRNGKey(0)
    x = jax.random.normal(key, (seq_len, batch, d_model), dtype=jnp.float32)

    pe = make_positional_encoding(d_model, max_seq_len)

    out = positional_encoder_forward(x, pe)
    out = jax.block_until_ready(out)

    # Reference check (pure JAX) for the same semantics.
    ref = x + pe[:seq_len].astype(x.dtype)
    assert out.shape == (seq_len, batch, d_model)
    assert jnp.allclose(out, ref, atol=1e-6), "mismatch vs reference"

    print("KERNEL_OK")
</pallas_src>

<mosaic_0001>
module attributes {stable_mosaic.version = 11 : i64} {
  func.func @_pe_add_kernel(%arg0: i32, %arg1: i32, %arg2: memref<32x8x128xf32, #tpu.memory_space<vmem>>, %arg3: memref<32x128xf32, #tpu.memory_space<vmem>>, %arg4: memref<32x8x128xf32, #tpu.memory_space<vmem>>) attributes {dimension_semantics = [#tpu.dimension_semantics<parallel>, #tpu.dimension_semantics<parallel>], iteration_bounds = array<i64: 2, 1>, scalar_prefetch = 0 : i64, scratch_operands = 0 : i64, tpu.core_type = #tpu.core_type<tc>, window_params = [{transform_indices = @transform_0, window_bounds = array<i64: 32, 8, 128>}, {transform_indices = @transform_1, window_bounds = array<i64: 32, 128>}, {transform_indices = @transform_2, window_bounds = array<i64: 32, 8, 128>}]} {
    %c0 = arith.constant 0 : index
    %c0_0 = arith.constant 0 : index
    %c0_1 = arith.constant 0 : index
    %0 = vector.load %arg2[%c0, %c0_0, %c0_1] : memref<32x8x128xf32, #tpu.memory_space<vmem>>, vector<32x8x128xf32>
    %c0_2 = arith.constant 0 : index
    %c0_3 = arith.constant 0 : index
    %1 = vector.load %arg3[%c0_2, %c0_3] : memref<32x128xf32, #tpu.memory_space<vmem>>, vector<32x128xf32>
    %2 = vector.shape_cast %1 : vector<32x128xf32> to vector<32x1x128xf32>
    %3 = vector.broadcast %2 : vector<32x1x128xf32> to vector<32x8x128xf32>
    %4 = arith.addf %0, %3 : vector<32x8x128xf32>
    %c0_4 = arith.constant 0 : index
    %c0_5 = arith.constant 0 : index
    %c0_6 = arith.constant 0 : index
    %5 = vector.load %arg4[%c0_4, %c0_5, %c0_6] : memref<32x8x128xf32, #tpu.memory_space<vmem>>, vector<32x8x128xf32>
    tpu.vector_store %arg4[%c0_4, %c0_5, %c0_6], %4 {strides = array<i32>} : memref<32x8x128xf32, #tpu.memory_space<vmem>>, vector<32x8x128xf32>,
    return
  }
  func.func @transform_0(%arg0: i32, %arg1: i32) -> (i32, i32, i32) {
    %c0_i32 = arith.constant 0 : i32
    %c0_i32_0 = arith.constant 0 : i32
    return %arg0, %arg1, %c0_i32 : i32, i32, i32
  }
  func.func @transform_1(%arg0: i32, %arg1: i32) -> (i32, i32) {
    %c0_i32 = arith.constant 0 : i32
    %c0_i32_0 = arith.constant 0 : i32
    return %arg0, %c0_i32 : i32, i32
  }
  func.func @transform_2(%arg0: i32, %arg1: i32) -> (i32, i32, i32) {
    %c0_i32 = arith.constant 0 : i32
    %c0_i32_0 = arith.constant 0 : i32
    return %arg0, %arg1, %c0_i32 : i32, i32, i32
  }
}

</mosaic_0001>

<llo_original>
// kernel: tpu_custom_call.1
$region0: #{tpu_custom_call.1}
  #allocation0 [shape = 'u32[]', space=smem, size = 0x4, offset = 0x4, fixed_abs, tag = 'smem constant byte address 0x4 - core index']
  #allocation1 [shape = 'u32[72,128]{1,0:T(1,128)}', space=vmem, size = 0x9000, scoped, tag = 'internal scratch']
  %s0 = inlined_call_operand.hbm [shape: f32[64,8,128], index: 0, kind: input, shape index: {}]
  %s1 = inlined_call_operand.hbm [shape: f32[64,128], index: 1, kind: input, shape index: {}]
  %s2 = inlined_call_operand.hbm [shape: f32[64,8,128], index: 2, kind: output, shape index: {}]
  %s3 = sld [smem:[#allocation0]]
  $region49: #{tpu_custom_call.1} parent=0
    _
  %s5 = ssub.s32 1, %s3
  %s6 = scalar_select 0, %s5, %s3
  $region1: #{tpu_custom_call.1} parent=0
    #allocation2 [shape = 'u8[262144]{0}', space=vmem, size = 0x40000, scoped, tag = 'input window, operand 0']
    #allocation3 [shape = 's32[2]{0}', space=sflag, size = 0x8, scoped, tag = 'scoped memory for tpu_custom_call.1']
    #allocation4 [shape = 's32[2]{0}', space=sflag, size = 0x8, scoped, tag = 'scoped memory for tpu_custom_call.1']
    #allocation5 [shape = 'u8[32768]{0}', space=vmem, size = 0x8000, scoped, tag = 'input window, operand 1']
    #allocation6 [shape = 's32[2]{0}', space=sflag, size = 0x8, scoped, tag = 'scoped memory for tpu_custom_call.1']
    #allocation7 [shape = 'u8[262144]{0}', space=vmem, size = 0x40000, scoped, tag = 'output window, operand 0']
    %7 = vsyncpa [#allocation3], 0
    %s8 = scalar_lea.sflag [#allocation3], 1
    %9 = vsyncpa %s8, 0
    %10 = vsyncpa [#allocation6], 0
    %s11 = scalar_lea.sflag [#allocation6], 1
    %12 = vsyncpa %s11, 0
    %13 = vsyncpa [#allocation4], 0
    %s14 = scalar_lea.sflag [#allocation4], 1
    %15 = vsyncpa %s14, 0
    loop: start=0, step=1, limit=4
    $region2: #{tpu_custom_call.1} parent=1 // loop_pre_header
      _
    $region3: #{tpu_custom_call.1} parent=1 // loop_header
      %s17 = sphi 0, %s21
      %p18 = scmp.ge.s32.totalorder %s17, 4
      %s24 = sphi 0, %s36
      %s25 = sphi 0, %s32
      %s26 = sphi 0, %s24
      %s27 = sphi 0, %s25
      %s28 = sphi 0, %s26
      %s29 = sphi 0, %s27
      %s41 = sphi 0, %s43
      %s44 = sphi 0, %s41
      %s45 = sphi 0, %s44
      %s61 = sphi 0, %s45
      %s67 = sphi 0, %s69
      %s70 = sphi 0, %s67
      %s71 = sphi 0, %s70
      %s87 = sphi 0, %s71
      %s95 = sphi 0, %s97
      %s98 = sphi 0, %s95
      %s99 = sphi 0, %s98
      %s115 = sphi 0, %s99
    $region4: #{tpu_custom_call.1} parent=1 // loop_header_branch
      %20 = sbr.rel (%p18) target = $region8
    $region5: #{tpu_custom_call.1} parent=1 // loop_body
      %s22 = ssub.s32 %s17, 1
      %s23 = ssub.s32 %s17, 2
      %s30 = sadd.s32 1, %s25
      %p31 = scmp.ge.s32.totalorder %s30, 1
      %s32 = scalar_select %p31, 0, %s30
      %s33 = sadd.s32 1, %s24
      %s34 = scalar_select %p31, %s33, %s24
      %p35 = scmp.ge.s32.totalorder %s34, 2
      %s36 = scalar_select %p35, 0, %s34
      %s37 = ssub.s32 %s24, %s36
      %s38 = ssub.s32 %s25, %s32
      %s39 = sor.u32 %s37, %s38
      %p40 = scmp.eq.s32.totalorder %s39, 0
      %s42 = sadd.s32 %s41, 1
      %s43 = scalar_select %p40, %s41, %s42
      %p46 = pneg %p40
      %p47 = scmp.eq.s32.totalorder %s17, 1
      %p48 = por %p46, %p47
      %p49 = scmp.ne.s32.totalorder %s41, %s44
      %p50 = scmp.eq.s32.totalorder %s17, 0
      %p51 = por %p49, %p50
      %p52 = scmp.ne.s32.totalorder %s41, %s44
      %p53 = scmp.eq.s32.totalorder %s22, 1
      %p54 = por %p52, %p53
      %p55 = scmp.ne.s32.totalorder %s44, %s45
      %p56 = scmp.eq.s32.totalorder %s22, 0
      %p57 = por %p55, %p56
      %p58 = scmp.ne.s32.totalorder %s44, %s45
      %p59 = scmp.eq.s32.totalorder %s23, 1
      %p60 = por %p58, %p59
      %p62 = scmp.ne.s32.totalorder %s45, %s61
      %p63 = scmp.eq.s32.totalorder %s23, 0
      %p64 = por %p62, %p63
      %s65 = ssub.s32 %s24, %s36
      %p66 = scmp.eq.s32.totalorder %s65, 0
      %s68 = sadd.s32 %s67, 1
      %s69 = scalar_select %p66, %s67, %s68
      %p72 = pneg %p66
      %p73 = scmp.eq.s32.totalorder %s17, 1
      %p74 = por %p72, %p73
      %p75 = scmp.ne.s32.totalorder %s67, %s70
      %p76 = scmp.eq.s32.totalorder %s17, 0
      %p77 = por %p75, %p76
      %p78 = scmp.ne.s32.totalorder %s67, %s70
      %p79 = scmp.eq.s32.totalorder %s22, 1
      %p80 = por %p78, %p79
      %p81 = scmp.ne.s32.totalorder %s70, %s71
      %p82 = scmp.eq.s32.totalorder %s22, 0
      %p83 = por %p81, %p82
      %p84 = scmp.ne.s32.totalorder %s70, %s71
      %p85 = scmp.eq.s32.totalorder %s23, 1
      %p86 = por %p84, %p85
      %p88 = scmp.ne.s32.totalorder %s71, %s87
      %p89 = scmp.eq.s32.totalorder %s23, 0
      %p90 = por %p88, %p89
      %s91 = ssub.s32 %s24, %s36
      %s92 = ssub.s32 %s25, %s32
      %s93 = sor.u32 %s91, %s92
      %p94 = scmp.eq.s32.totalorder %s93, 0
      %s96 = sadd.s32 %s95, 1
      %s97 = scalar_select %p94, %s95, %s96
      %p100 = pneg %p94
      %p101 = scmp.eq.s32.totalorder %s17, 1
      %p102 = por %p100, %p101
      %p103 = scmp.ne.s32.totalorder %s95, %s98
      %p104 = scmp.eq.s32.totalorder %s17, 0
      %p105 = por %p103, %p104
      %p106 = scmp.ne.s32.totalorder %s95, %s98
      %p107 = scmp.eq.s32.totalorder %s22, 1
      %p108 = por %p106, %p107
      %p109 = scmp.ne.s32.totalorder %s98, %s99
      %p110 = scmp.eq.s32.totalorder %s22, 0
      %p111 = por %p109, %p110
      %p112 = scmp.ne.s32.totalorder %s98, %s99
      %p113 = scmp.eq.s32.totalorder %s23, 1
      %p114 = por %p112, %p113
      %p116 = scmp.ne.s32.totalorder %s99, %s115
      %p117 = scmp.eq.s32.totalorder %s23, 0
      %p118 = por %p116, %p117
      %p119 = scmp.le.s32.totalorder 1, %s17
      %p120 = scmp.lt.s32.totalorder %s17, 3
      %p121 = pnand %p119, %p120
      %p122 = pneg %p121
      // Predicated region
      $region9: #{tpu_custom_call.1} parent=5 // pred_check
        _
      $region10: #{tpu_custom_call.1} parent=5 // pred_check_branch
        %124 = sbr.rel (%p121) target = $region12
      $region11: #{tpu_custom_call.1} parent=5 // pred_region
        %s125 = ssub.s32 %s17, 1
      $region12: #{tpu_custom_call.1} parent=5 // pred_fallthru
        _
      %p126 = scmp.lt.s32.totalorder %s17, 2
      // Predicated region
      $region13: #{tpu_custom_call.1} parent=5 // pred_check
        %p127 = pneg %p126
      $region14: #{tpu_custom_call.1} parent=5 // pred_check_branch
        %129 = sbr.rel (%p127) target = $region16
      $region15: #{tpu_custom_call.1} parent=5 // pred_region
        // Predicated region
        $region17: #{tpu_custom_call.1} parent=15 // pred_check
          %p130 = pneg %p51
        $region18: #{tpu_custom_call.1} parent=15 // pred_check_branch
          %132 = sbr.rel (%p130) target = $region20
        $region19: #{tpu_custom_call.1} parent=15 // pred_region
          %s133 = sand.u32 %s41, 1
          %s134 = scalar_lea.sflag [#allocation3], %s133
          %s135 = sand.u32 %s41, 1
          %s136 = smul.addr %s135, 256
          %s137 = scalar_lea.vmem [#allocation2], %s136
          %s138 = smul.u32 32, %s24
          %140 = vsyncadd %s134, 0
          %s141 = sadd.s32 %s25, %s138
          %s142 = smul.addr %s141, 8
          %s143 = scalar_lea.hbm %s0, %s142
          %s144 = sshll.u32 %s143, 4
          %s145 = int_to_ptr.hbm [resolvable:$true] %s144
          %s146 = sshll.u32 %s137, 4
          %s147 = int_to_ptr.vmem [resolvable:$true] %s146
          %152 = dma.hbm_to_vmem [thread:$0]  %s145, 4096, %s147, %s134, 128, 128, 8
        $region20: #{tpu_custom_call.1} parent=15 // pred_fallthru
          _
        // Predicated region
        $region21: #{tpu_custom_call.1} parent=15 // pred_check
          %p153 = pneg %p77
        $region22: #{tpu_custom_call.1} parent=15 // pred_check_branch
          %155 = sbr.rel (%p153) target = $region24
        $region23: #{tpu_custom_call.1} parent=15 // pred_region
          %s156 = sand.u32 %s67, 1
          %s157 = scalar_lea.sflag [#allocation6], %s156
          %s158 = sand.u32 %s67, 1
          %s159 = smul.addr %s158, 32
          %s160 = scalar_lea.vmem [#allocation5], %s159
          %s161 = smul.u32 4, %s24
          %163 = vsyncadd %s157, 0
          %s164 = smul.addr %s161, 8
          %s165 = scalar_lea.hbm %s1, %s164
          %s166 = sshll.u32 %s165, 4
          %s167 = int_to_ptr.hbm [resolvable:$true] %s166
          %s168 = sshll.u32 %s160, 4
          %s169 = int_to_ptr.vmem [resolvable:$true] %s168
          %174 = dma.hbm_to_vmem [thread:$0]  %s167, 512, %s169, %s157, 128, 128, 8
        $region24: #{tpu_custom_call.1} parent=15 // pred_fallthru
          _
      $region16: #{tpu_custom_call.1} parent=5 // pred_fallthru
        _
      %p175 = scmp.le.s32.totalorder 1, %s17
      %p176 = scmp.lt.s32.totalorder %s17, 3
      %p177 = pnand %p175, %p176
      %p178 = pneg %p177
      // Predicated region
      $region25: #{tpu_custom_call.1} parent=5 // pred_check
        _
      $region26: #{tpu_custom_call.1} parent=5 // pred_check_branch
        %180 = sbr.rel (%p177) target = $region28
      $region27: #{tpu_custom_call.1} parent=5 // pred_region
        %s181 = ssub.s32 %s17, 1
        %s182 = sand.u32 %s44, 1
        %s183 = scalar_lea.sflag [#allocation3], %s182
        %s184 = sand.u32 %s44, 1
        %s185 = smul.addr %s184, 256
        %s186 = scalar_lea.vmem [#allocation2], %s185
        // Predicated region
        $region29: #{tpu_custom_call.1} parent=27 // pred_check
          %p187 = pneg %p57
        $region30: #{tpu_custom_call.1} parent=27 // pred_check_branch
          %189 = sbr.rel (%p187) target = $region32
        $region31: #{tpu_custom_call.1} parent=27 // pred_region
          %191 = dma.done %s183, 4096
        $region32: #{tpu_custom_call.1} parent=27 // pred_fallthru
          _
        %s192 = sand.u32 %s70, 1
        %s193 = scalar_lea.sflag [#allocation6], %s192
        %s194 = sand.u32 %s70, 1
        %s195 = smul.addr %s194, 32
        %s196 = scalar_lea.vmem [#allocation5], %s195
        // Predicated region
        $region33: #{tpu_custom_call.1} parent=27 // pred_check
          %p197 = pneg %p83
        $region34: #{tpu_custom_call.1} parent=27 // pred_check_branch
          %199 = sbr.rel (%p197) target = $region36
        $region35: #{tpu_custom_call.1} parent=27 // pred_region
          %201 = dma.done %s193, 512
        $region36: #{tpu_custom_call.1} parent=27 // pred_fallthru
          _
        %s202 = sand.u32 %s44, 1
        %s203 = scalar_lea.sflag [#allocation3], %s202
        %s204 = sand.u32 %s44, 1
        %s205 = smul.addr %s204, 256
        %s206 = scalar_lea.vmem [#allocation2], %s205
        %p207 = pneg %p57
        %p208 = pneg %p54
        %s209 = sand.u32 %s70, 1
        %s210 = scalar_lea.sflag [#allocation6], %s209
        %s211 = sand.u32 %s70, 1
        %s212 = smul.addr %s211, 32
        %s213 = scalar_lea.vmem [#allocation5], %s212
        %p214 = pneg %p83
        %p215 = pneg %p80
        %p216 = pneg %p111
        %p217 = pneg %p108
        %s218 = sand.u32 %s98, 1
        %s219 = scalar_lea.sflag [#allocation4], %s218
        %s220 = sand.u32 %s98, 1
        %s221 = smul.addr %s220, 256
        %s222 = scalar_lea.vmem [#allocation7], %s221
        %s223 = smul.u32 32, %s26
        %s224 = smul.u32 4, %s26
        %s225 = smul.u32 32, %s26
        %v226 = vld [vmem:[%s186] sm:$0xff]
        %v227 = vld [vmem:[%s186 + $0x8] sm:$0xff]
        %v228 = vld [vmem:[%s186 + $0x10] sm:$0xff]
        %v229 = vld [vmem:[%s186 + $0x18] sm:$0xff]
        %v230 = vld [vmem:[%s186 + $0x20] sm:$0xff]
        %v231 = vld [vmem:[%s186 + $0x28] sm:$0xff]
        %v232 = vld [vmem:[%s186 + $0x30] sm:$0xff]
        %v233 = vld [vmem:[%s186 + $0x38] sm:$0xff]
        %v234 = vld [vmem:[%s186 + $0x40] sm:$0xff]
        %v235 = vld [vmem:[%s186 + $0x48] sm:$0xff]
        %v236 = vld [vmem:[%s186 + $0x50] sm:$0xff]
        %v237 = vld [vmem:[%s186 + $0x58] sm:$0xff]
        %v238 = vld [vmem:[%s186 + $0x60] sm:$0xff]
        %v239 = vld [vmem:[%s186 + $0x68] sm:$0xff]
        %v240 = vld [vmem:[%s186 + $0x70] sm:$0xff]
        %v241 = vld [vmem:[%s186 + $0x78] sm:$0xff]
        %v242 = vld [vmem:[%s186 + $0x80] sm:$0xff]
        %v243 = vld [vmem:[%s186 + $0x88] sm:$0xff]
        %v244 = vld [vmem:[%s186 + $0x90] sm:$0xff]
        %v245 = vld [vmem:[%s186 + $0x98] sm:$0xff]
        %v246 = vld [vmem:[%s186 + $0xa0] sm:$0xff]
        %v247 = vld [vmem:[%s186 + $0xa8] sm:$0xff]
        %v248 = vld [vmem:[%s186 + $0xb0] sm:$0xff]
        %v249 = vld [vmem:[%s186 + $0xb8] sm:$0xff]
        %v250 = vld [vmem:[%s186 + $0xc0] sm:$0xff]
        %v251 = vld [vmem:[%s186 + $0xc8] sm:$0xff]
        %v252 = vld [vmem:[%s186 + $0xd0] sm:$0xff]
        %v253 = vld [vmem:[%s186 + $0xd8] sm:$0xff]
        %v254 = vld [vmem:[%s186 + $0xe0] sm:$0xff]
        %v255 = vld [vmem:[%s186 + $0xe8] sm:$0xff]
        %v256 = vld [vmem:[%s186 + $0xf0] sm:$0xff]
        %v257 = vld [vmem:[%s186 + $0xf8] sm:$0xff]
        %v258 = vld [vmem:[%s196] sm:$0xff]
        %v259 = vld [vmem:[%s196 + $0x8] sm:$0xff]
        %v260 = vld [vmem:[%s196 + $0x10] sm:$0xff]
        %v261 = vld [vmem:[%s196 + $0x18] sm:$0xff]
        %v266 = vrot.slane %v258, 1
        %v267 = vrot.slane %v258, 2
        %v268 = vrot.slane %v258, 3
        %v269 = vrot.slane %v258, 4
        %v270 = vrot.slane %v258, 5
        %v271 = vrot.slane %v258, 6
        %v272 = vrot.slane %v258, 7
        %v273 = vrot.slane %v259, 1
        %v274 = vrot.slane %v259, 2
        %v275 = vrot.slane %v259, 3
        %v276 = vrot.slane %v259, 4
        %v277 = vrot.slane %v259, 5
        %v278 = vrot.slane %v259, 6
        %v279 = vrot.slane %v259, 7
        %v280 = vrot.slane %v260, 1
        %v281 = vrot.slane %v260, 2
        %v282 = vrot.slane %v260, 3
        %v283 = vrot.slane %v260, 4
        %v284 = vrot.slane %v260, 5
        %v285 = vrot.slane %v260, 6
        %v286 = vrot.slane %v260, 7
        %v287 = vrot.slane %v261, 1
        %v288 = vrot.slane %v261, 2
        %v289 = vrot.slane %v261, 3
        %v290 = vrot.slane %v261, 4
        %v291 = vrot.slane %v261, 5
        %v292 = vrot.slane %v261, 6
        %v293 = vrot.slane %v261, 7
        %v294 = vperm.slane %v258, 0
        %v295 = vperm.slane %v266, 0
        %v296 = vperm.slane %v267, 0
        %v297 = vperm.slane %v268, 0
        %v298 = vperm.slane %v269, 0
        %v299 = vperm.slane %v270, 0
        %v300 = vperm.slane %v271, 0
        %v301 = vperm.slane %v272, 0
        %v302 = vperm.slane %v259, 0
        %v303 = vperm.slane %v273, 0
        %v304 = vperm.slane %v274, 0
        %v305 = vperm.slane %v275, 0
        %v306 = vperm.slane %v276, 0
        %v307 = vperm.slane %v277, 0
        %v308 = vperm.slane %v278, 0
        %v309 = vperm.slane %v279, 0
        %v310 = vperm.slane %v260, 0
        %v311 = vperm.slane %v280, 0
        %v312 = vperm.slane %v281, 0
        %v313 = vperm.slane %v282, 0
        %v314 = vperm.slane %v283, 0
        %v315 = vperm.slane %v284, 0
        %v316 = vperm.slane %v285, 0
        %v317 = vperm.slane %v286, 0
        %v318 = vperm.slane %v261, 0
        %v319 = vperm.slane %v287, 0
        %v320 = vperm.slane %v288, 0
        %v321 = vperm.slane %v289, 0
        %v322 = vperm.slane %v290, 0
        %v323 = vperm.slane %v291, 0
        %v324 = vperm.slane %v292, 0
        %v325 = vperm.slane %v293, 0
        %v358 = vadd.f32 %v226, %v294
        %v359 = vadd.f32 %v227, %v295
        %v360 = vadd.f32 %v228, %v296
        %v361 = vadd.f32 %v229, %v297
        %v362 = vadd.f32 %v230, %v298
        %v363 = vadd.f32 %v231, %v299
        %v364 = vadd.f32 %v232, %v300
        %v365 = vadd.f32 %v233, %v301
        %v366 = vadd.f32 %v234, %v302
        %v367 = vadd.f32 %v235, %v303
        %v368 = vadd.f32 %v236, %v304
        %v369 = vadd.f32 %v237, %v305
        %v370 = vadd.f32 %v238, %v306
        %v371 = vadd.f32 %v239, %v307
        %v372 = vadd.f32 %v240, %v308
        %v373 = vadd.f32 %v241, %v309
        %v374 = vadd.f32 %v242, %v310
        %v375 = vadd.f32 %v243, %v311
        %v376 = vadd.f32 %v244, %v312
        %v377 = vadd.f32 %v245, %v313
        %v378 = vadd.f32 %v246, %v314
        %v379 = vadd.f32 %v247, %v315
        %v380 = vadd.f32 %v248, %v316
        %v381 = vadd.f32 %v249, %v317
        %v382 = vadd.f32 %v250, %v318
        %v383 = vadd.f32 %v251, %v319
        %v384 = vadd.f32 %v252, %v320
        %v385 = vadd.f32 %v253, %v321
        %v386 = vadd.f32 %v254, %v322
        %v387 = vadd.f32 %v255, %v323
        %v388 = vadd.f32 %v256, %v324
        %v389 = vadd.f32 %v257, %v325
        %390 = vst [vmem:[%s222] sm:$0xff] %v358
        %391 = vst [vmem:[%s222 + $0x8] sm:$0xff] %v359
        %392 = vst [vmem:[%s222 + $0x10] sm:$0xff] %v360
        %393 = vst [vmem:[%s222 + $0x18] sm:$0xff] %v361
        %394 = vst [vmem:[%s222 + $0x20] sm:$0xff] %v362
        %395 = vst [vmem:[%s222 + $0x28] sm:$0xff] %v363
        %396 = vst [vmem:[%s222 + $0x30] sm:$0xff] %v364
        %397 = vst [vmem:[%s222 + $0x38] sm:$0xff] %v365
        %398 = vst [vmem:[%s222 + $0x40] sm:$0xff] %v366
        %399 = vst [vmem:[%s222 + $0x48] sm:$0xff] %v367
        %400 = vst [vmem:[%s222 + $0x50] sm:$0xff] %v368
        %401 = vst [vmem:[%s222 + $0x58] sm:$0xff] %v369
        %402 = vst [vmem:[%s222 + $0x60] sm:$0xff] %v370
        %403 = vst [vmem:[%s222 + $0x68] sm:$0xff] %v371
        %404 = vst [vmem:[%s222 + $0x70] sm:$0xff] %v372
        %405 = vst [vmem:[%s222 + $0x78] sm:$0xff] %v373
        %406 = vst [vmem:[%s222 + $0x80] sm:$0xff] %v374
        %407 = vst [vmem:[%s222 + $0x88] sm:$0xff] %v375
        %408 = vst [vmem:[%s222 + $0x90] sm:$0xff] %v376
        %409 = vst [vmem:[%s222 + $0x98] sm:$0xff] %v377
        %410 = vst [vmem:[%s222 + $0xa0] sm:$0xff] %v378
        %411 = vst [vmem:[%s222 + $0xa8] sm:$0xff] %v379
        %412 = vst [vmem:[%s222 + $0xb0] sm:$0xff] %v380
        %413 = vst [vmem:[%s222 + $0xb8] sm:$0xff] %v381
        %414 = vst [vmem:[%s222 + $0xc0] sm:$0xff] %v382
        %415 = vst [vmem:[%s222 + $0xc8] sm:$0xff] %v383
        %416 = vst [vmem:[%s222 + $0xd0] sm:$0xff] %v384
        %417 = vst [vmem:[%s222 + $0xd8] sm:$0xff] %v385
        %418 = vst [vmem:[%s222 + $0xe0] sm:$0xff] %v386
        %419 = vst [vmem:[%s222 + $0xe8] sm:$0xff] %v387
        %420 = vst [vmem:[%s222 + $0xf0] sm:$0xff] %v388
        %421 = vst [vmem:[%s222 + $0xf8] sm:$0xff] %v389
        %s422 = sand.u32 %s98, 1
        %s423 = scalar_lea.sflag [#allocation4], %s422
        %s424 = sand.u32 %s98, 1
        %s425 = smul.addr %s424, 256
        %s426 = scalar_lea.vmem [#allocation7], %s425
        // Predicated region
        $region37: #{tpu_custom_call.1} parent=27 // pred_check
          %p427 = pneg %p108
        $region38: #{tpu_custom_call.1} parent=27 // pred_check_branch
          %429 = sbr.rel (%p427) target = $region40
        $region39: #{tpu_custom_call.1} parent=27 // pred_region
          %s430 = smul.u32 32, %s26
          %432 = vsyncadd %s423, 0
          %s433 = sadd.s32 %s27, %s430
          %s434 = smul.addr %s433, 8
          %s435 = scalar_lea.hbm %s2, %s434
          %s436 = sshll.u32 %s426, 4
          %s437 = int_to_ptr.vmem [resolvable:$true] %s436
          %s438 = sshll.u32 %s435, 4
          %s439 = int_to_ptr.hbm [resolvable:$true] %s438
          %444 = dma.vmem_to_hbm [thread:$0]  %s437, 4096, %s439, %s423, 128, 128, 8
        $region40: #{tpu_custom_call.1} parent=27 // pred_fallthru
          _
      $region28: #{tpu_custom_call.1} parent=5 // pred_fallthru
        _
      %p445 = scmp.le.s32.totalorder 2, %s17
      // Predicated region
      $region41: #{tpu_custom_call.1} parent=5 // pred_check
        %p446 = pneg %p445
      $region42: #{tpu_custom_call.1} parent=5 // pred_check_branch
        %448 = sbr.rel (%p446) target = $region44
      $region43: #{tpu_custom_call.1} parent=5 // pred_region
        %s449 = ssub.s32 %s17, 2
        // Predicated region
        $region45: #{tpu_custom_call.1} parent=43 // pred_check
          %p450 = pneg %p114
        $region46: #{tpu_custom_call.1} parent=43 // pred_check_branch
          %452 = sbr.rel (%p450) target = $region48
        $region47: #{tpu_custom_call.1} parent=43 // pred_region
          %s453 = sand.u32 %s99, 1
          %s454 = scalar_lea.sflag [#allocation4], %s453
          %s455 = sand.u32 %s99, 1
          %s456 = smul.addr %s455, 256
          %s457 = scalar_lea.vmem [#allocation7], %s456
          %459 = dma.done %s454, 4096
        $region48: #{tpu_custom_call.1} parent=43 // pred_fallthru
          _
      $region44: #{tpu_custom_call.1} parent=5 // pred_fallthru
        _
    $region6: #{tpu_custom_call.1} parent=1 // loop_footer
      %s21 = sadd.s32 1, %s17
    $region7: #{tpu_custom_call.1} parent=1 // loop_footer_branch
      %16 = sbr.rel target = $region3
    $region8: #{tpu_custom_call.1} parent=1 // loop_exit
      _
    %460 = vsyncpa [#allocation3], 1
    %s461 = scalar_lea.sflag [#allocation3], 1
    %462 = vsyncpa %s461, 1
    %463 = vsyncpa [#allocation6], 1
    %s464 = scalar_lea.sflag [#allocation6], 1
    %465 = vsyncpa %s464, 1
    %466 = vsyncpa [#allocation4], 1
    %s467 = scalar_lea.sflag [#allocation4], 1
    %468 = vsyncpa %s467, 1

</llo_original>
